<compile_context>
chip_gen: v5e
topology: v5e:2x2
jax: 0.10.0
libtpu: 0.0.40
codegen_flags: <defaults>
</compile_context>

<pallas_src>
import jax
import jax.numpy as jnp
import numpy as np
from jax.experimental import pallas as pl
from jax.experimental.pallas import tpu as pltpu

EPS = 1e-5


# -----------------------------------------------------------------------------
# In-kernel helpers
# -----------------------------------------------------------------------------
def _conv3x3_band(x2d_f32, w_ref, H):
    """3x3 conv (stride 1, pad 1) as three accumulating MXU dots (one per kh tap).

    x2d_f32 : (M, W*Cin) f32, M = NB*H rows of NB whole images.
    w_ref   : (3, W*Cin, W*Cout) bf16 band-diagonal weight (kw taps folded in).
    Shifted rows via pltpu.roll (sublane axis) + image-edge masks; no 3x-wide
    lhs, no zero-padded copies, no scratch. Returns f32 (M, W*Cout) value.
    """
    M, _ = x2d_f32.shape
    row = jax.lax.broadcasted_iota(jnp.int32, (M, 1), 0) % H
    up = jnp.where(row == 0, 0.0, pltpu.roll(x2d_f32, shift=1, axis=0))
    down = jnp.where(row == H - 1, 0.0, pltpu.roll(x2d_f32, shift=M - 1, axis=0))
    acc = jnp.dot(x2d_f32.astype(jnp.bfloat16), w_ref[1],
                  preferred_element_type=jnp.float32)
    acc += jnp.dot(up.astype(jnp.bfloat16), w_ref[0],
                   preferred_element_type=jnp.float32)
    acc += jnp.dot(down.astype(jnp.bfloat16), w_ref[2],
                   preferred_element_type=jnp.float32)
    return acc


def _lane_stats(acc):
    """Per-lane [sum; sum-of-squares] of an (M, WC) f32 tile -> (1, 2, WC)."""
    colsum = jnp.sum(acc, axis=0, keepdims=True)
    colsq = jnp.sum(acc * acc, axis=0, keepdims=True)
    return jnp.concatenate([colsum, colsq], axis=0).reshape(1, 2, acc.shape[1])


def conv1_stats_kernel(x_ref, w_ref, y_ref, stats_ref):
    """conv1 (pre-BN) + partial BN1 statistics for this batch block."""
    NB, H, WC = x_ref.shape
    x2 = x_ref[...].reshape(NB * H, WC).astype(jnp.float32)
    acc = _conv3x3_band(x2, w_ref, H)
    stats_ref[...] = _lane_stats(acc)
    y_ref[...] = acc.astype(y_ref.dtype).reshape(NB, H, WC)


def bn1_conv2_stats_kernel(y1_ref, sb1_ref, w_ref, y_ref, stats_ref):
    """bn1 (folded scale/bias) + relu + conv2 (pre-BN) + partial BN2 stats."""
    NB, H, WC = y1_ref.shape
    y1 = y1_ref[...].reshape(NB * H, WC).astype(jnp.float32)
    o1 = jnp.maximum(y1 * sb1_ref[0:1, :] + sb1_ref[1:2, :], 0.0)
    acc = _conv3x3_band(o1, w_ref, H)
    stats_ref[...] = _lane_stats(acc)
    y_ref[...] = acc.astype(y_ref.dtype).reshape(NB, H, WC)


def bn2_add_relu_kernel(y2_ref, x_ref, sb2_ref, out_ref):
    """bn2 (folded scale/bias) + residual add + relu."""
    NB, H, WC = y2_ref.shape
    y2 = y2_ref[...].reshape(NB * H, WC).astype(jnp.float32)
    idn = x_ref[...].reshape(NB * H, WC).astype(jnp.float32)
    out = jnp.maximum(y2 * sb2_ref[0:1, :] + sb2_ref[1:2, :] + idn, 0.0)
    out_ref[...] = out.astype(out_ref.dtype).reshape(NB, H, WC)


# -----------------------------------------------------------------------------
# Wrapper-side: tile sizing, BN fold, weight preprocessing, forward
# -----------------------------------------------------------------------------
def _step_vmem_bytes(NB, H, WC):
    """Rough per-grid-step VMEM working set (double-buffered I/O + weights +
    in-kernel f32 temporaries)."""
    tile_bf16 = NB * H * WC * 2
    tile_f32 = NB * H * WC * 4
    wband = 3 * WC * WC * 2
    return 2 * (2 * tile_bf16) + 2 * (2 * tile_bf16) + wband + 6 * tile_f32 + (2 << 20)


def _pick_images_per_block(N, H, WC, target_rows=512, budget=48 << 20):
    """Largest batch block (divisor of N) that fits the VMEM budget; stop once
    the per-dot M dimension reaches target_rows (MXU fill/drain and ~0.35 us
    per-grid-step overhead are amortized by then)."""
    best = 1
    for nb in range(1, N + 1):
        if N % nb:
            continue
        if _step_vmem_bytes(nb, H, WC) > budget:
            break
        best = nb
        if nb * H >= target_rows:
            break
    return best


def _fold_bn(partial_stats, gamma, beta, count, W):
    """Combine per-block partial stats and fold train-mode BN (biased batch
    variance, eps=1e-5) into per-lane scale/bias rows. Tiny XLA ops on
    (n_blocks, 2, W*C) data between the gridded pallas_calls."""
    C = gamma.shape[0]
    s = jnp.sum(partial_stats, axis=0)                       # (2, WC)
    per_ch = jnp.sum(s.reshape(2, W, C), axis=1)             # (2, C)
    mean = per_ch[0] / count
    var = jnp.maximum(per_ch[1] / count - mean * mean, 0.0)  # clamp E[x^2]-E[x]^2
    scale_c = gamma * jax.lax.rsqrt(var + EPS)
    bias_c = beta - mean * scale_c
    # lane l = w*C + c  ->  tile per-channel rows across the W lane groups
    return jnp.stack([jnp.tile(scale_c, W), jnp.tile(bias_c, W)], axis=0)  # (2, WC)


def _band_weights(w_oihw, W):
    """Fold the 3 kw taps of a 3x3 conv into a band-diagonal weight, one
    (W*Cin, W*Cout) slab per kh tap. Zero outside |wi - wo| <= 1 (W padding)."""
    Cout, Cin, _, _ = w_oihw.shape
    w_hwio = jnp.transpose(w_oihw, (2, 3, 1, 0))             # (3, 3, Cin, Cout)
    wi = jnp.arange(W)[:, None]
    wo = jnp.arange(W)[None, :]
    kw = wi - wo + 1
    valid = ((kw >= 0) & (kw <= 2)).astype(w_hwio.dtype)
    blocks = w_hwio[:, jnp.clip(kw, 0, 2)]                   # (3, W, W, Cin, Cout)
    blocks = blocks * valid[None, :, :, None, None]
    return jnp.transpose(blocks, (0, 1, 3, 2, 4)).reshape(3, W * Cin, W * Cout)


def prepare_params(params, W):
    """One-time preprocessing into kernel-ready tensors (cache per model)."""
    return {
        "W": W,
        "wb1": _band_weights(params["w1"], W).astype(jnp.bfloat16),
        "wb2": _band_weights(params["w2"], W).astype(jnp.bfloat16),
        "g1": params["gamma1"].astype(jnp.float32),
        "b1": params["beta1"].astype(jnp.float32),
        "g2": params["gamma2"].astype(jnp.float32),
        "b2": params["beta2"].astype(jnp.float32),
    }


def basic_block_forward(x_slab, prep, images_per_block=None):
    """BasicBlock forward on a lane-dense (N, H, W*C) bf16 slab -> bf16 slab."""
    x_slab = x_slab.astype(jnp.bfloat16)
    N, H, WC = x_slab.shape
    W = prep["W"]
    assert WC % 128 == 0 and H % 8 == 0, "need W*C % 128 == 0 and H % 8 == 0"
    assert prep["wb1"].shape == (3, WC, WC), "requires inplanes == planes"

    NB = images_per_block or _pick_images_per_block(N, H, WC)
    assert N % NB == 0
    nblk = N // NB
    count = float(N * H * W)

    cp = pltpu.CompilerParams(
        dimension_semantics=("parallel",),   # batch-block axis: megacore-shardable
        vmem_limit_bytes=int(min(max(_step_vmem_bytes(NB, H, WC), 16 << 20), 48 << 20)),
    )

    img = pl.BlockSpec((NB, H, WC), lambda i: (i, 0, 0))     # streamed image tiles
    wband = pl.BlockSpec((3, WC, WC), lambda i: (0, 0, 0))   # resident band weight
    sb = pl.BlockSpec((2, WC), lambda i: (0, 0))             # resident scale/bias rows
    st = pl.BlockSpec((1, 2, WC), lambda i: (i, 0, 0))       # per-block partial stats

    slab_ty = jax.ShapeDtypeStruct((N, H, WC), jnp.bfloat16)
    stats_ty = jax.ShapeDtypeStruct((nblk, 2, WC), jnp.float32)

    # ---- phase 1: conv1 + partial BN1 stats ----
    y1, st1 = pl.pallas_call(
        conv1_stats_kernel,
        grid=(nblk,),
        in_specs=[img, wband],
        out_specs=[img, st],
        out_shape=[slab_ty, stats_ty],
        compiler_params=cp,
    )(x_slab, prep["wb1"])
    sb1 = _fold_bn(st1, prep["g1"], prep["b1"], count, W)

    # ---- phase 2: bn1 + relu + conv2 + partial BN2 stats ----
    y2, st2 = pl.pallas_call(
        bn1_conv2_stats_kernel,
        grid=(nblk,),
        in_specs=[img, sb, wband],
        out_specs=[img, st],
        out_shape=[slab_ty, stats_ty],
        compiler_params=cp,
    )(y1, sb1, prep["wb2"])
    sb2 = _fold_bn(st2, prep["g2"], prep["b2"], count, W)

    # ---- phase 3: bn2 + residual add + relu ----
    out = pl.pallas_call(
        bn2_add_relu_kernel,
        grid=(nblk,),
        in_specs=[img, img, sb],
        out_specs=img,
        out_shape=slab_ty,
        compiler_params=cp,
    )(y2, x_slab, sb2)
    return out


# -----------------------------------------------------------------------------
# Model-boundary relayout (done once per network, not per block)
# -----------------------------------------------------------------------------
def to_slab(x_nchw):
    N, C, H, W = x_nchw.shape
    return jnp.transpose(x_nchw, (0, 2, 3, 1)).reshape(N, H, W * C).astype(jnp.bfloat16)


def from_slab(y_slab, C):
    N, H, WC = y_slab.shape
    W = WC // C
    return jnp.transpose(y_slab.reshape(N, H, W, C), (0, 3, 1, 2)).astype(jnp.float32)


# -----------------------------------------------------------------------------
# Params, pure-JAX reference, self-test
# -----------------------------------------------------------------------------
def init_params(key, inplanes, planes):
    assert inplanes == planes, "BasicBlock default path: inplanes == planes"
    k1, k2, k3, k4 = jax.random.split(key, 4)
    s1 = (2.0 / (9 * inplanes)) ** 0.5
    s2 = (2.0 / (9 * planes)) ** 0.5
    return {
        "w1": jax.random.normal(k1, (planes, inplanes, 3, 3), jnp.float32) * s1,
        "w2": jax.random.normal(k2, (planes, planes, 3, 3), jnp.float32) * s2,
        "gamma1": 1.0 + 0.1 * jax.random.normal(k3, (planes,), jnp.float32),
        "beta1": 0.1 * jax.random.normal(k4, (planes,), jnp.float32),
        "gamma2": jnp.ones((planes,), jnp.float32),
        "beta2": jnp.zeros((planes,), jnp.float32),
    }


def reference_forward(x, params):
    def conv(z, w):
        return jax.lax.conv_general_dilated(
            z, w, window_strides=(1, 1), padding=((1, 1), (1, 1)),
            dimension_numbers=("NCHW", "OIHW", "NCHW"),
            precision=jax.lax.Precision.HIGHEST)

    def bn(z, g, b):
        m = jnp.mean(z, axis=(0, 2, 3), keepdims=True)
        v = jnp.mean((z - m) ** 2, axis=(0, 2, 3), keepdims=True)
        return ((z - m) * jax.lax.rsqrt(v + EPS) * g.reshape(1, -1, 1, 1)
                + b.reshape(1, -1, 1, 1))

    o = jax.nn.relu(bn(conv(x, params["w1"]), params["gamma1"], params["beta1"]))
    o = bn(conv(o, params["w2"]), params["gamma2"], params["beta2"]) + x
    return jax.nn.relu(o)


if __name__ == "__main__":
    key = jax.random.PRNGKey(0)
    kx, kp = jax.random.split(key)

    N, C, H, W = 2, 8, 16, 16          # inplanes = planes = 8; W*C = 128 lanes
    x = jax.random.normal(kx, (N, C, H, W), jnp.float32)
    params = init_params(kp, inplanes=C, planes=C)
    prep = prepare_params(params, W)

    x_slab = to_slab(x)                # model-boundary relayout (done once)
    y_slab = basic_block_forward(x_slab, prep)
    y = from_slab(y_slab, C)
    jax.block_until_ready(y)
    assert y.shape == (N, C, H, W) and y.dtype == jnp.float32

    # Loose tolerance: bf16 matmul operands and bf16 slab I/O (f32 accumulate/BN).
    ref = reference_forward(x, params)
    np.testing.assert_allclose(np.asarray(y), np.asarray(ref), rtol=0.1, atol=0.1)

    print("KERNEL_OK")
</pallas_src>

<mosaic_0001>
module attributes {stable_mosaic.version = 11 : i64} {
  func.func @conv1_stats_kernel(%arg0: i32, %arg1: memref<2x16x128xbf16, #tpu.memory_space<vmem>>, %arg2: memref<3x128x128xbf16, #tpu.memory_space<vmem>>, %arg3: memref<2x16x128xbf16, #tpu.memory_space<vmem>>, %arg4: memref<1x2x128xf32, #tpu.memory_space<vmem>>) attributes {dimension_semantics = [#tpu.dimension_semantics<parallel>], iteration_bounds = array<i64: 1>, scalar_prefetch = 0 : i64, scratch_operands = 0 : i64, tpu.core_type = #tpu.core_type<tc>, window_params = [{transform_indices = @transform_0, window_bounds = array<i64: 2, 16, 128>}, {pipeline_mode = #tpu.pipeline_mode<synchronous>, transform_indices = @transform_1, window_bounds = array<i64: 3, 128, 128>}, {transform_indices = @transform_2, window_bounds = array<i64: 2, 16, 128>}, {transform_indices = @transform_3, window_bounds = array<i64: 1, 2, 128>}]} {
    %c0 = arith.constant 0 : index
    %c0_0 = arith.constant 0 : index
    %c0_1 = arith.constant 0 : index
    %0 = vector.load %arg1[%c0, %c0_0, %c0_1] : memref<2x16x128xbf16, #tpu.memory_space<vmem>>, vector<2x16x128xbf16>
    %1 = vector.shape_cast %0 : vector<2x16x128xbf16> to vector<32x128xbf16>
    %2 = arith.extf %1 : vector<32x128xbf16> to vector<32x128xf32>
    %3 = tpu.iota {dimensions = array<i32: 0>} : vector<32x1xi32>
    %c16_i32 = arith.constant 16 : i32
    %c0_i32 = arith.constant 0 : i32
    %4 = arith.cmpi eq, %c16_i32, %c0_i32 : i32
    %c1_i32 = arith.constant 1 : i32
    %5 = arith.select %4, %c1_i32, %c16_i32 : i32
    %6 = vector.broadcast %5 : i32 to vector<32x1xi32>
    %7 = arith.remsi %3, %6 : vector<32x1xi32>
    %c0_i32_2 = arith.constant 0 : i32
    %8 = vector.broadcast %c0_i32_2 : i32 to vector<32x1xi32>
    %9 = arith.cmpi ne, %7, %8 : vector<32x1xi32>
    %c0_i32_3 = arith.constant 0 : i32
    %10 = vector.broadcast %c0_i32_3 : i32 to vector<32x1xi32>
    %11 = arith.cmpi slt, %7, %10 : vector<32x1xi32>
    %c0_i32_4 = arith.constant 0 : i32
    %12 = arith.cmpi slt, %5, %c0_i32_4 : i32
    %13 = vector.broadcast %12 : i1 to vector<32x1xi1>
    %14 = vector.broadcast %13 : vector<32x1xi1> to vector<32x1xi1>
    %15 = arith.xori %11, %14 : vector<32x1xi1>
    %16 = arith.andi %15, %9 : vector<32x1xi1>
    %17 = vector.broadcast %5 : i32 to vector<32x1xi32>
    %18 = arith.addi %7, %17 : vector<32x1xi32>
    %19 = arith.select %16, %18, %7 : vector<32x1xi1>, vector<32x1xi32>
    %c0_i32_5 = arith.constant 0 : i32
    %20 = vector.broadcast %c0_i32_5 : i32 to vector<32x1xi32>
    %21 = arith.cmpi eq, %19, %20 : vector<32x1xi32>
    %c1_i32_6 = arith.constant 1 : i32
    %22 = tpu.dynamic_rotate %2 by %c1_i32_6 dim 0 : vector<32x128xf32>, i32 -> vector<32x128xf32>
    %cst = arith.constant 0.000000e+00 : f32
    %23 = vector.shape_cast %21 : vector<32x1xi1> to vector<32x1xi1>
    %24 = vector.broadcast %23 : vector<32x1xi1> to vector<32x128xi1>
    %25 = vector.broadcast %cst : f32 to vector<32x128xf32>
    %26 = arith.select %24, %25, %22 : vector<32x128xi1>, vector<32x128xf32>
    %c15_i32 = arith.constant 15 : i32
    %27 = vector.broadcast %c15_i32 : i32 to vector<32x1xi32>
    %28 = arith.cmpi eq, %19, %27 : vector<32x1xi32>
    %c31_i32 = arith.constant 31 : i32
    %29 = tpu.dynamic_rotate %2 by %c31_i32 dim 0 : vector<32x128xf32>, i32 -> vector<32x128xf32>
    %cst_7 = arith.constant 0.000000e+00 : f32
    %30 = vector.shape_cast %28 : vector<32x1xi1> to vector<32x1xi1>
    %31 = vector.broadcast %30 : vector<32x1xi1> to vector<32x128xi1>
    %32 = vector.broadcast %cst_7 : f32 to vector<32x128xf32>
    %33 = arith.select %31, %32, %29 : vector<32x128xi1>, vector<32x128xf32>
    %34 = arith.truncf %2 : vector<32x128xf32> to vector<32x128xbf16>
    %c1 = arith.constant 1 : index
    %c0_8 = arith.constant 0 : index
    %c0_9 = arith.constant 0 : index
    %35 = vector.load %arg2[%c1, %c0_8, %c0_9] : memref<3x128x128xbf16, #tpu.memory_space<vmem>>, vector<1x128x128xbf16>
    %36 = vector.shape_cast %35 : vector<1x128x128xbf16> to vector<128x128xbf16>
    %cst_10 = arith.constant dense<0.000000e+00> : vector<32x128xf32>
    %37 = tpu.matmul %34, %36, %cst_10 {dimension_numbers = #tpu.dot_dimension_numbers<[1], [0], [0], [1], [0, 0, 1, 1], [], []>} : vector<32x128xbf16>, vector<128x128xbf16>, vector<32x128xf32> -> vector<32x128xf32>
    %38 = arith.truncf %26 : vector<32x128xf32> to vector<32x128xbf16>
    %c0_11 = arith.constant 0 : index
    %c0_12 = arith.constant 0 : index
    %c0_13 = arith.constant 0 : index
    %39 = vector.load %arg2[%c0_11, %c0_12, %c0_13] : memref<3x128x128xbf16, #tpu.memory_space<vmem>>, vector<1x128x128xbf16>
    %40 = vector.shape_cast %39 : vector<1x128x128xbf16> to vector<128x128xbf16>
    %cst_14 = arith.constant dense<0.000000e+00> : vector<32x128xf32>
    %41 = tpu.matmul %38, %40, %cst_14 {dimension_numbers = #tpu.dot_dimension_numbers<[1], [0], [0], [1], [0, 0, 1, 1], [], []>} : vector<32x128xbf16>, vector<128x128xbf16>, vector<32x128xf32> -> vector<32x128xf32>
    %42 = arith.addf %37, %41 : vector<32x128xf32>
    %43 = arith.truncf %33 : vector<32x128xf32> to vector<32x128xbf16>
    %c2 = arith.constant 2 : index
    %c0_15 = arith.constant 0 : index
    %c0_16 = arith.constant 0 : index
    %44 = vector.load %arg2[%c2, %c0_15, %c0_16] : memref<3x128x128xbf16, #tpu.memory_space<vmem>>, vector<1x128x128xbf16>
    %45 = vector.shape_cast %44 : vector<1x128x128xbf16> to vector<128x128xbf16>
    %cst_17 = arith.constant dense<0.000000e+00> : vector<32x128xf32>
    %46 = tpu.matmul %43, %45, %cst_17 {dimension_numbers = #tpu.dot_dimension_numbers<[1], [0], [0], [1], [0, 0, 1, 1], [], []>} : vector<32x128xbf16>, vector<128x128xbf16>, vector<32x128xf32> -> vector<32x128xf32>
    %47 = arith.addf %42, %46 : vector<32x128xf32>
    %cst_18 = arith.constant dense<0.000000e+00> : vector<128xf32>
    %48 = vector.multi_reduction <add>, %47, %cst_18 [0] : vector<32x128xf32> to vector<128xf32>
    %49 = vector.shape_cast %48 : vector<128xf32> to vector<1x128xf32>
    %50 = arith.mulf %47, %47 : vector<32x128xf32>
    %cst_19 = arith.constant dense<0.000000e+00> : vector<128xf32>
    %51 = vector.multi_reduction <add>, %50, %cst_19 [0] : vector<32x128xf32> to vector<128xf32>
    %52 = vector.shape_cast %51 : vector<128xf32> to vector<1x128xf32>
    %53 = tpu.concatenate %49, %52 in 0 : vector<1x128xf32>, vector<1x128xf32> -> vector<2x128xf32>
    %54 = vector.shape_cast %53 : vector<2x128xf32> to vector<1x2x128xf32>
    %c0_20 = arith.constant 0 : index
    %c0_21 = arith.constant 0 : index
    %c0_22 = arith.constant 0 : index
    %55 = vector.load %arg4[%c0_20, %c0_21, %c0_22] : memref<1x2x128xf32, #tpu.memory_space<vmem>>, vector<1x2x128xf32>
    tpu.vector_store %arg4[%c0_20, %c0_21, %c0_22], %54 {strides = array<i32>} : memref<1x2x128xf32, #tpu.memory_space<vmem>>, vector<1x2x128xf32>,
    %56 = arith.truncf %47 : vector<32x128xf32> to vector<32x128xbf16>
    %57 = vector.shape_cast %56 : vector<32x128xbf16> to vector<2x16x128xbf16>
    %c0_23 = arith.constant 0 : index
    %c0_24 = arith.constant 0 : index
    %c0_25 = arith.constant 0 : index
    %58 = vector.load %arg3[%c0_23, %c0_24, %c0_25] : memref<2x16x128xbf16, #tpu.memory_space<vmem>>, vector<2x16x128xbf16>
    tpu.vector_store %arg3[%c0_23, %c0_24, %c0_25], %57 {strides = array<i32>} : memref<2x16x128xbf16, #tpu.memory_space<vmem>>, vector<2x16x128xbf16>,
    return
  }
  func.func @transform_0(%arg0: i32) -> (i32, i32, i32) {
    %c0_i32 = arith.constant 0 : i32
    %c0_i32_0 = arith.constant 0 : i32
    %c0_i32_1 = arith.constant 0 : i32
    return %arg0, %c0_i32, %c0_i32_0 : i32, i32, i32
  }
  func.func @transform_1(%arg0: i32) -> (i32, i32, i32) {
    %c0_i32 = arith.constant 0 : i32
    %c0_i32_0 = arith.constant 0 : i32
    %c0_i32_1 = arith.constant 0 : i32
    %c0_i32_2 = arith.constant 0 : i32
    return %c0_i32, %c0_i32_0, %c0_i32_1 : i32, i32, i32
  }
  func.func @transform_2(%arg0: i32) -> (i32, i32, i32) {
    %c0_i32 = arith.constant 0 : i32
    %c0_i32_0 = arith.constant 0 : i32
    %c0_i32_1 = arith.constant 0 : i32
    return %arg0, %c0_i32, %c0_i32_0 : i32, i32, i32
  }
  func.func @transform_3(%arg0: i32) -> (i32, i32, i32) {
    %c0_i32 = arith.constant 0 : i32
    %c0_i32_0 = arith.constant 0 : i32
    %c0_i32_1 = arith.constant 0 : i32
    return %arg0, %c0_i32, %c0_i32_0 : i32, i32, i32
  }
}

</mosaic_0001>

<llo_original>
// kernel: tpu_custom_call.1
$region0: #{tpu_custom_call.1}
  #allocation0 [shape = 'u32[]', space=smem, size = 0x4, offset = 0x4, fixed_abs, tag = 'smem constant byte address 0x4 - core index']
  #allocation1 [shape = 'u32[72,128]{1,0:T(1,128)}', space=vmem, size = 0x9000, scoped, tag = 'internal scratch']
  %s0 = inlined_call_operand.hbm [shape: bf16[2,16,128], index: 0, kind: input, shape index: {}]
  %s1 = inlined_call_operand.hbm [shape: bf16[3,128,128], index: 1, kind: input, shape index: {}]
  %s2 = inlined_call_operand.hbm [shape: bf16[2,16,128], index: 2, kind: output, shape index: {0}]
  %s3 = inlined_call_operand.hbm [shape: f32[1,2,128], index: 3, kind: output, shape index: {1}]
  %4 = xla_tuple %s2, %s3
  %s5 = sld [smem:[#allocation0]]
  $region34: #{tpu_custom_call.1} parent=0
    _
  %s7 = ssub.s32 1, %s5
  %s8 = scalar_select 0, %s7, %s5
  $region1: #{tpu_custom_call.1} parent=0
    #allocation2 [shape = 'u8[8192]{0}', space=vmem, size = 0x2000, scoped, tag = 'input window, operand 0, single buffered']
    #allocation3 [shape = 's32[1]{0}', space=sflag, size = 0x4, scoped, tag = 'scoped memory for tpu_custom_call.1']
    #allocation4 [shape = 's32[1]{0}', space=sflag, size = 0x4, scoped, tag = 'scoped memory for tpu_custom_call.1']
    #allocation5 [shape = 'u8[98304]{0}', space=vmem, size = 0x18000, scoped, tag = 'input window, operand 1, single buffered']
    #allocation6 [shape = 's32[1]{0}', space=sflag, size = 0x4, scoped, tag = 'scoped memory for tpu_custom_call.1']
    #allocation7 [shape = 'u8[8192]{0}', space=vmem, size = 0x2000, scoped, tag = 'output window, operand 0, single buffered']
    #allocation8 [shape = 'u8[1024]{0}', space=vmem, size = 0x400, scoped, tag = 'output window, operand 1, single buffered']
    #allocation9 [shape = 's32[1]{0}', space=sflag, size = 0x4, scoped, tag = 'scoped memory for tpu_custom_call.1']
    %9 = vsyncpa [#allocation3], 0
    %10 = vsyncpa [#allocation6], 0
    %11 = vsyncpa [#allocation4], 0
    %12 = vsyncpa [#allocation9], 0
    // Predicated region
    $region2: #{tpu_custom_call.1} parent=1 // pred_check
      _
    $region3: #{tpu_custom_call.1} parent=1 // pred_check_branch
      %14 = sbr.rel (0) target = $region5
    $region4: #{tpu_custom_call.1} parent=1 // pred_region
      %16 = vsyncadd [#allocation3], 0
      %s17 = sshll.u32 %s0, 4
      %s18 = int_to_ptr.hbm [resolvable:$true] %s17
      %s19 = sshll.u32 [#allocation2], 4
      %s20 = int_to_ptr.vmem [resolvable:$true] %s19
      %25 = dma.hbm_to_vmem [thread:$0]  %s18, 256, %s20, [#allocation3], 64, 64, 4
    $region5: #{tpu_custom_call.1} parent=1 // pred_fallthru
      _
    // Predicated region
    $region6: #{tpu_custom_call.1} parent=1 // pred_check
      _
    $region7: #{tpu_custom_call.1} parent=1 // pred_check_branch
      %27 = sbr.rel (0) target = $region9
    $region8: #{tpu_custom_call.1} parent=1 // pred_region
      %29 = vsyncadd [#allocation6], 0
      %s30 = sshll.u32 %s1, 4
      %s31 = int_to_ptr.hbm [resolvable:$true] %s30
      %s32 = sshll.u32 [#allocation5], 4
      %s33 = int_to_ptr.vmem [resolvable:$true] %s32
      %38 = dma.hbm_to_vmem [thread:$0]  %s31, 3072, %s33, [#allocation6], 64, 64, 4
    $region9: #{tpu_custom_call.1} parent=1 // pred_fallthru
      _
    // Predicated region
    $region10: #{tpu_custom_call.1} parent=1 // pred_check
      _
    $region11: #{tpu_custom_call.1} parent=1 // pred_check_branch
      %40 = sbr.rel (0) target = $region13
    $region12: #{tpu_custom_call.1} parent=1 // pred_region
      %42 = dma.done [#allocation3], 256
    $region13: #{tpu_custom_call.1} parent=1 // pred_fallthru
      _
    // Predicated region
    $region14: #{tpu_custom_call.1} parent=1 // pred_check
      _
    $region15: #{tpu_custom_call.1} parent=1 // pred_check_branch
      %44 = sbr.rel (0) target = $region17
    $region16: #{tpu_custom_call.1} parent=1 // pred_region
      %46 = dma.done [#allocation6], 3072
    $region17: #{tpu_custom_call.1} parent=1 // pred_fallthru
      _
    %v47 = vld [vmem:[#allocation2] sm:$0xf]
    %v48 = vld [vmem:[#allocation2 + $0x4] sm:$0xf]
    %v49 = vld [vmem:[#allocation2 + $0x8] sm:$0xf]
    %v50 = vld [vmem:[#allocation2 + $0xc] sm:$0xf]
    %v51 = vunpack.c.l.bf16 %v47
    %v52 = vunpack.c.l.bf16 %v48
    %v53 = vunpack.c.l.bf16 %v49
    %v54 = vunpack.c.l.bf16 %v50
    %v55 = vlaneseq
    %v56 = vshrl.u32 %v55, 7
    %v57 = vadd.s32 %v56, 8
    %v58 = vadd.s32 %v56, 16
    %v59 = vadd.s32 %v56, 24
    %vm60 = vcmp.lt.s32.totalorder %v56, 0
    %v61 = vsub.s32 0, %v56
    %v62 = vsel %vm60, %v61, %v56
    %v63 = vshrl.u32 %v62, 4
    %v64 = vand.u32 %v62, 15
    %v65 = vsub.s32 0, %v64
    %v66 = vsel %vm60, %v65, %v64
    %vm67 = vcmp.lt.s32.totalorder %v57, 0
    %v68 = vsub.s32 0, %v57
    %v69 = vsel %vm67, %v68, %v57
    %v70 = vshrl.u32 %v69, 4
    %v71 = vand.u32 %v69, 15
    %v72 = vsub.s32 0, %v71
    %v73 = vsel %vm67, %v72, %v71
    %vm74 = vcmp.lt.s32.totalorder %v58, 0
    %v75 = vsub.s32 0, %v58
    %v76 = vsel %vm74, %v75, %v58
    %v77 = vshrl.u32 %v76, 4
    %v78 = vand.u32 %v76, 15
    %v79 = vsub.s32 0, %v78
    %v80 = vsel %vm74, %v79, %v78
    %vm81 = vcmp.lt.s32.totalorder %v59, 0
    %v82 = vsub.s32 0, %v59
    %v83 = vsel %vm81, %v82, %v59
    %v84 = vshrl.u32 %v83, 4
    %v85 = vand.u32 %v83, 15
    %v86 = vsub.s32 0, %v85
    %v87 = vsel %vm81, %v86, %v85
    %vm88 = vcmp.ne.s32.totalorder %v66, 0
    %vm89 = vcmp.ne.s32.totalorder %v73, 0
    %vm90 = vcmp.ne.s32.totalorder %v80, 0
    %vm91 = vcmp.ne.s32.totalorder %v87, 0
    %vm92 = vcmp.lt.s32.totalorder %v66, 0
    %vm93 = vcmp.lt.s32.totalorder %v73, 0
    %vm94 = vcmp.lt.s32.totalorder %v80, 0
    %vm95 = vcmp.lt.s32.totalorder %v87, 0
    %vm96 = vmand %vm92, %vm88
    %vm97 = vmand %vm93, %vm89
    %vm98 = vmand %vm94, %vm90
    %vm99 = vmand %vm95, %vm91
    %v100 = vadd.s32 %v66, 16
    %v101 = vadd.s32 %v73, 16
    %v102 = vadd.s32 %v80, 16
    %v103 = vadd.s32 %v87, 16
    %v104 = vsel %vm96, %v100, %v66
    %v105 = vsel %vm97, %v101, %v73
    %v106 = vsel %vm98, %v102, %v80
    %v107 = vsel %vm99, %v103, %v87
    %vm108 = vcmp.eq.s32.totalorder %v104, 0
    %vm109 = vcmp.eq.s32.totalorder %v105, 0
    %vm110 = vcmp.eq.s32.totalorder %v106, 0
    %vm111 = vcmp.eq.s32.totalorder %v107, 0
    %v112 = vrot.slane %v51, 7
    %v113 = vrot.slane %v52, 7
    %v114 = vrot.slane %v53, 7
    %v115 = vrot.slane %v54, 7
    %vm116 = vcmp.lt.s32.totalorder %v56, 1
    %v117 = vsel %vm116, %v114, %v115
    %v118 = vsel %vm116, %v113, %v114
    %v119 = vsel %vm116, %v112, %v113
    %v120 = vsel %vm116, %v115, %v112
    %v121 = vsel %vm108, 1, 0
    %v122 = vsel %vm109, 1, 0
    %v123 = vsel %vm110, 1, 0
    %v124 = vsel %vm111, 1, 0
    %vm125 = vcmp.eq.s32.totalorder %v121, 1
    %vm126 = vcmp.eq.s32.totalorder %v122, 1
    %vm127 = vcmp.eq.s32.totalorder %v123, 1
    %vm128 = vcmp.eq.s32.totalorder %v124, 1
    %v129 = vsel %vm125, 0.0, %v120
    %v130 = vsel %vm126, 0.0, %v119
    %v131 = vsel %vm127, 0.0, %v118
    %v132 = vsel %vm128, 0.0, %v117
    %vm133 = vcmp.eq.s32.totalorder %v104, 15
    %vm134 = vcmp.eq.s32.totalorder %v105, 15
    %vm135 = vcmp.eq.s32.totalorder %v106, 15
    %vm136 = vcmp.eq.s32.totalorder %v107, 15
    %v137 = vrot.slane %v51, 1
    %v138 = vrot.slane %v52, 1
    %v139 = vrot.slane %v53, 1
    %v140 = vrot.slane %v54, 1
    %vm141 = vcmp.lt.s32.totalorder %v56, 7
    %v142 = vsel %vm141, %v139, %v140
    %v143 = vsel %vm141, %v138, %v139
    %v144 = vsel %vm141, %v137, %v138
    %v145 = vsel %vm141, %v140, %v137
    %v146 = vsel %vm133, 1, 0
    %v147 = vsel %vm134, 1, 0
    %v148 = vsel %vm135, 1, 0
    %v149 = vsel %vm136, 1, 0
    %vm150 = vcmp.eq.s32.totalorder %v146, 1
    %vm151 = vcmp.eq.s32.totalorder %v147, 1
    %vm152 = vcmp.eq.s32.totalorder %v148, 1
    %vm153 = vcmp.eq.s32.totalorder %v149, 1
    %v154 = vsel %vm150, 0.0, %v144
    %v155 = vsel %vm151, 0.0, %v143
    %v156 = vsel %vm152, 0.0, %v142
    %v157 = vsel %vm153, 0.0, %v145
    %s158 = scalar_lea.vmem [#allocation5], 64
    %v159 = vld [vmem:[%s158] sm:$0xf]
    %v160 = vld [vmem:[%s158 + $0x4] sm:$0xf]
    %v161 = vld [vmem:[%s158 + $0x8] sm:$0xf]
    %v162 = vld [vmem:[%s158 + $0xc] sm:$0xf]
    %v163 = vld [vmem:[%s158 + $0x10] sm:$0xf]
    %v164 = vld [vmem:[%s158 + $0x14] sm:$0xf]
    %v165 = vld [vmem:[%s158 + $0x18] sm:$0xf]
    %v166 = vld [vmem:[%s158 + $0x1c] sm:$0xf]
    %v167 = vld [vmem:[%s158 + $0x20] sm:$0xf]
    %v168 = vld [vmem:[%s158 + $0x24] sm:$0xf]
    %v169 = vld [vmem:[%s158 + $0x28] sm:$0xf]
    %v170 = vld [vmem:[%s158 + $0x2c] sm:$0xf]
    %v171 = vld [vmem:[%s158 + $0x30] sm:$0xf]
    %v172 = vld [vmem:[%s158 + $0x34] sm:$0xf]
    %v173 = vld [vmem:[%s158 + $0x38] sm:$0xf]
    %v174 = vld [vmem:[%s158 + $0x3c] sm:$0xf]
    %v175 = vpack.c.bf16 %v130, %v129
    %v176 = vpack.c.bf16 %v132, %v131
    %v177 = vld [vmem:[#allocation5] sm:$0xf]
    %v178 = vld [vmem:[#allocation5 + $0x4] sm:$0xf]
    %v179 = vld [vmem:[#allocation5 + $0x8] sm:$0xf]
    %v180 = vld [vmem:[#allocation5 + $0xc] sm:$0xf]
    %v181 = vld [vmem:[#allocation5 + $0x10] sm:$0xf]
    %v182 = vld [vmem:[#allocation5 + $0x14] sm:$0xf]
    %v183 = vld [vmem:[#allocation5 + $0x18] sm:$0xf]
    %v184 = vld [vmem:[#allocation5 + $0x1c] sm:$0xf]
    %v185 = vld [vmem:[#allocation5 + $0x20] sm:$0xf]
    %v186 = vld [vmem:[#allocation5 + $0x24] sm:$0xf]
    %v187 = vld [vmem:[#allocation5 + $0x28] sm:$0xf]
    %v188 = vld [vmem:[#allocation5 + $0x2c] sm:$0xf]
    %v189 = vld [vmem:[#allocation5 + $0x30] sm:$0xf]
    %v190 = vld [vmem:[#allocation5 + $0x34] sm:$0xf]
    %v191 = vld [vmem:[#allocation5 + $0x38] sm:$0xf]
    %v192 = vld [vmem:[#allocation5 + $0x3c] sm:$0xf]
    %v209 = vunpack.c.l.b16 %v177
    %v210 = vunpack.c.l.b16 %v178
    %v211 = vunpack.c.l.b16 %v179
    %v212 = vunpack.c.l.b16 %v180
    %v213 = vunpack.c.l.b16 %v181
    %v214 = vunpack.c.l.b16 %v182
    %v215 = vunpack.c.l.b16 %v183
    %v216 = vunpack.c.l.b16 %v184
    %v217 = vunpack.c.l.b16 %v185
    %v218 = vunpack.c.l.b16 %v186
    %v219 = vunpack.c.l.b16 %v187
    %v220 = vunpack.c.l.b16 %v188
    %v221 = vunpack.c.l.b16 %v189
    %v222 = vunpack.c.l.b16 %v190
    %v223 = vunpack.c.l.b16 %v191
    %v224 = vunpack.c.l.b16 %v192
    %v225 = vpack.c.b16 %v210, %v209
    %v226 = vpack.c.b16 %v212, %v211
    %v227 = vpack.c.b16 %v214, %v213
    %v228 = vpack.c.b16 %v216, %v215
    %v229 = vpack.c.b16 %v218, %v217
    %v230 = vpack.c.b16 %v220, %v219
    %v231 = vpack.c.b16 %v222, %v221
    %v232 = vpack.c.b16 %v224, %v223
    %241 = vmatpush.bf16.msra.mxu0 %v232
    %242 = vmatpush.bf16.msra.mxu0 %v231
    %243 = vmatpush.bf16.msra.mxu0 %v230
    %244 = vmatpush.bf16.msra.mxu0 %v229
    %245 = vmatpush.bf16.msra.mxu0 %v228
    %246 = vmatpush.bf16.msra.mxu0 %v227
    %247 = vmatpush.bf16.msra.mxu0 %v226
    %248 = vmatpush.bf16.msra.mxu0 %v225
    %249 = vmatmul.bf16.gmra.mxu0 %v175
    %v250 = vpop.f32.mrf.mxu0
    %v251 = vadd.f32 0.0, %v250
    %v252 = vpop.f32.mrf.mxu0
    %v253 = vadd.f32 0.0, %v252
    %254 = vmatmul.bf16.gmra.mxu0 %v176
    %v255 = vpop.f32.mrf.mxu0
    %v256 = vadd.f32 0.0, %v255
    %v257 = vpop.f32.mrf.mxu0
    %v258 = vadd.f32 0.0, %v257
    %259 = vdwg.mxu0
    %v264 = vunpack.c.l.b16 %v47
    %v265 = vunpack.c.l.b16 %v48
    %v266 = vunpack.c.l.b16 %v49
    %v267 = vunpack.c.l.b16 %v50
    %v268 = vpack.c.b16 %v265, %v264
    %v269 = vpack.c.b16 %v267, %v266
    %v288 = vunpack.c.l.b16 %v159
    %v289 = vunpack.c.l.b16 %v160
    %v290 = vunpack.c.l.b16 %v161
    %v291 = vunpack.c.l.b16 %v162
    %v292 = vunpack.c.l.b16 %v163
    %v293 = vunpack.c.l.b16 %v164
    %v294 = vunpack.c.l.b16 %v165
    %v295 = vunpack.c.l.b16 %v166
    %v296 = vunpack.c.l.b16 %v167
    %v297 = vunpack.c.l.b16 %v168
    %v298 = vunpack.c.l.b16 %v169
    %v299 = vunpack.c.l.b16 %v170
    %v300 = vunpack.c.l.b16 %v171
    %v301 = vunpack.c.l.b16 %v172
    %v302 = vunpack.c.l.b16 %v173
    %v303 = vunpack.c.l.b16 %v174
    %v304 = vpack.c.b16 %v289, %v288
    %v305 = vpack.c.b16 %v291, %v290
    %v306 = vpack.c.b16 %v293, %v292
    %v307 = vpack.c.b16 %v295, %v294
    %v308 = vpack.c.b16 %v297, %v296
    %v309 = vpack.c.b16 %v299, %v298
    %v310 = vpack.c.b16 %v301, %v300
    %v311 = vpack.c.b16 %v303, %v302
    %320 = vmatpush.bf16.msra.mxu0 %v311
    %321 = vmatpush.bf16.msra.mxu0 %v310
    %322 = vmatpush.bf16.msra.mxu0 %v309
    %323 = vmatpush.bf16.msra.mxu0 %v308
    %324 = vmatpush.bf16.msra.mxu0 %v307
    %325 = vmatpush.bf16.msra.mxu0 %v306
    %326 = vmatpush.bf16.msra.mxu0 %v305
    %327 = vmatpush.bf16.msra.mxu0 %v304
    %328 = vmatmul.bf16.gmra.mxu0 %v268
    %v329 = vpop.f32.mrf.mxu0
    %v330 = vadd.f32 %v251, %v329
    %v331 = vpop.f32.mrf.mxu0
    %v332 = vadd.f32 %v253, %v331
    %333 = vmatmul.bf16.gmra.mxu0 %v269
    %v334 = vpop.f32.mrf.mxu0
    %v335 = vadd.f32 %v256, %v334
    %v336 = vpop.f32.mrf.mxu0
    %v337 = vadd.f32 %v258, %v336
    %338 = vdwg.mxu0
    %v339 = vpack.c.bf16 %v155, %v154
    %v340 = vpack.c.bf16 %v157, %v156
    %s341 = scalar_lea.vmem [#allocation5], 128
    %v342 = vld [vmem:[%s341] sm:$0xf]
    %v343 = vld [vmem:[%s341 + $0x4] sm:$0xf]
    %v344 = vld [vmem:[%s341 + $0x8] sm:$0xf]
    %v345 = vld [vmem:[%s341 + $0xc] sm:$0xf]
    %v346 = vld [vmem:[%s341 + $0x10] sm:$0xf]
    %v347 = vld [vmem:[%s341 + $0x14] sm:$0xf]
    %v348 = vld [vmem:[%s341 + $0x18] sm:$0xf]
    %v349 = vld [vmem:[%s341 + $0x1c] sm:$0xf]
    %v350 = vld [vmem:[%s341 + $0x20] sm:$0xf]
    %v351 = vld [vmem:[%s341 + $0x24] sm:$0xf]
    %v352 = vld [vmem:[%s341 + $0x28] sm:$0xf]
    %v353 = vld [vmem:[%s341 + $0x2c] sm:$0xf]
    %v354 = vld [vmem:[%s341 + $0x30] sm:$0xf]
    %v355 = vld [vmem:[%s341 + $0x34] sm:$0xf]
    %v356 = vld [vmem:[%s341 + $0x38] sm:$0xf]
    %v357 = vld [vmem:[%s341 + $0x3c] sm:$0xf]
    %v374 = vunpack.c.l.b16 %v342
    %v375 = vunpack.c.l.b16 %v343
    %v376 = vunpack.c.l.b16 %v344
    %v377 = vunpack.c.l.b16 %v345
    %v378 = vunpack.c.l.b16 %v346
    %v379 = vunpack.c.l.b16 %v347
    %v380 = vunpack.c.l.b16 %v348
    %v381 = vunpack.c.l.b16 %v349
    %v382 = vunpack.c.l.b16 %v350
    %v383 = vunpack.c.l.b16 %v351
    %v384 = vunpack.c.l.b16 %v352
    %v385 = vunpack.c.l.b16 %v353
    %v386 = vunpack.c.l.b16 %v354
    %v387 = vunpack.c.l.b16 %v355
    %v388 = vunpack.c.l.b16 %v356
    %v389 = vunpack.c.l.b16 %v357
    %v390 = vpack.c.b16 %v375, %v374
    %v391 = vpack.c.b16 %v377, %v376
    %v392 = vpack.c.b16 %v379, %v378
    %v393 = vpack.c.b16 %v381, %v380
    %v394 = vpack.c.b16 %v383, %v382
    %v395 = vpack.c.b16 %v385, %v384
    %v396 = vpack.c.b16 %v387, %v386
    %v397 = vpack.c.b16 %v389, %v388
    %406 = vmatpush.bf16.msra.mxu0 %v397
    %407 = vmatpush.bf16.msra.mxu0 %v396
    %408 = vmatpush.bf16.msra.mxu0 %v395
    %409 = vmatpush.bf16.msra.mxu0 %v394
    %410 = vmatpush.bf16.msra.mxu0 %v393
    %411 = vmatpush.bf16.msra.mxu0 %v392
    %412 = vmatpush.bf16.msra.mxu0 %v391
    %413 = vmatpush.bf16.msra.mxu0 %v390
    %414 = vmatmul.bf16.gmra.mxu0 %v339
    %v415 = vpop.f32.mrf.mxu0
    %v416 = vadd.f32 0.0, %v415
    %v417 = vpop.f32.mrf.mxu0
    %v418 = vadd.f32 0.0, %v417
    %419 = vmatmul.bf16.gmra.mxu0 %v340
    %v420 = vpop.f32.mrf.mxu0
    %v421 = vadd.f32 0.0, %v420
    %v422 = vpop.f32.mrf.mxu0
    %v423 = vadd.f32 0.0, %v422
    %424 = vdwg.mxu0
    %v425 = vadd.f32 %v330, %v416
    %v426 = vadd.f32 %v332, %v418
    %v427 = vadd.f32 %v335, %v421
    %v428 = vadd.f32 %v337, %v423
    %v429 = vadd.f32 %v425, %v426
    %v430 = vadd.f32 %v429, %v427
    %v431 = vadd.f32 %v430, %v428
    %v432 = vrot.slane %v431, 4
    %v433 = vadd.f32 %v431, %v432
    %v434 = vrot.slane %v433, 2
    %v435 = vadd.f32 %v433, %v434
    %v436 = vrot.slane %v435, 1
    %v437 = vadd.f32 %v435, %v436
    %v438 = vmul.f32 %v425, %v425
    %v439 = vmul.f32 %v426, %v426
    %v440 = vmul.f32 %v427, %v427
    %v441 = vmul.f32 %v428, %v428
    %v442 = vadd.f32 %v438, %v439
    %v443 = vadd.f32 %v442, %v440
    %v444 = vadd.f32 %v443, %v441
    %v445 = vrot.slane %v444, 4
    %v446 = vadd.f32 %v444, %v445
    %v447 = vrot.slane %v446, 2
    %v448 = vadd.f32 %v446, %v447
    %v449 = vrot.slane %v448, 1
    %v450 = vadd.f32 %v448, %v449
    %vm451 = vcmask 1040384
    %v452 = vsel %vm451, %v437, %v450
    %453 = vst [vmem:[#allocation8] sm:$0x3] %v452
    %v454 = vpack.c.bf16 %v425, %v425
    %v455 = vpack.c.bf16 %v426, %v426
    %v456 = vpack.c.bf16 %v427, %v427
    %v457 = vpack.c.bf16 %v428, %v428
    %458 = vst [vmem:[#allocation7] sm:$0xf] %v454
    %459 = vst [vmem:[#allocation7 + $0x4] sm:$0xf] %v455
    %460 = vst [vmem:[#allocation7 + $0x8] sm:$0xf] %v456
    %461 = vst [vmem:[#allocation7 + $0xc] sm:$0xf] %v457
    // Predicated region
    $region18: #{tpu_custom_call.1} parent=1 // pred_check
      _
    $region19: #{tpu_custom_call.1} parent=1 // pred_check_branch
      %463 = sbr.rel (0) target = $region21
    $region20: #{tpu_custom_call.1} parent=1 // pred_region
      %465 = vsyncadd [#allocation4], 0
      %s466 = sshll.u32 [#allocation7], 4
      %s467 = int_to_ptr.vmem [resolvable:$true] %s466
      %s468 = sshll.u32 %s2, 4
      %s469 = int_to_ptr.hbm [resolvable:$true] %s468
      %474 = dma.vmem_to_hbm [thread:$0]  %s467, 256, %s469, [#allocation4], 64, 64, 4
    $region21: #{tpu_custom_call.1} parent=1 // pred_fallthru
      _
    // Predicated region
    $region22: #{tpu_custom_call.1} parent=1 // pred_check
      _
    $region23: #{tpu_custom_call.1} parent=1 // pred_check_branch
      %476 = sbr.rel (0) target = $region25
    $region24: #{tpu_custom_call.1} parent=1 // pred_region
      %478 = vsyncadd [#allocation9], 0
      %s480 = sshll.u32 [#allocation8], 4
      %s481 = int_to_ptr.vmem [resolvable:$true] %s480
      %s482 = sshll.u32 %s3, 4
      %s483 = int_to_ptr.hbm [resolvable:$true] %s482
      %485 = dma.vmem_to_hbm [thread:$0]  %s481, 32, %s483, [#allocation9]
    $region25: #{tpu_custom_call.1} parent=1 // pred_fallthru
      _
    // Predicated region
    $region26: #{tpu_custom_call.1} parent=1 // pred_check
      _
    $region27: #{tpu_custom_call.1} parent=1 // pred_check_branch
      %487 = sbr.rel (0) target = $region29
    $region28: #{tpu_custom_call.1} parent=1 // pred_region
      %489 = dma.done [#allocation4], 256
    $region29: #{tpu_custom_call.1} parent=1 // pred_fallthru
      _
    // Predicated region
    $region30: #{tpu_custom_call.1} parent=1 // pred_check
      _
    $region31: #{tpu_custom_call.1} parent=1 // pred_check_branch
      %491 = sbr.rel (0) target = $region33
    $region32: #{tpu_custom_call.1} parent=1 // pred_region
      %493 = dma.done [#allocation9], 32
    $region33: #{tpu_custom_call.1} parent=1 // pred_fallthru
      _
    %494 = vsyncpa [#allocation3], 1
    %495 = vsyncpa [#allocation6], 1
    %496 = vsyncpa [#allocation4], 1
    %497 = vsyncpa [#allocation9], 1

</llo_original>
